<compile_context>
chip_gen: v7x
topology: tpu7x:2x2x1
jax: 0.10.0
libtpu: 0.0.40
codegen_flags: <defaults>
</compile_context>

<pallas_src>
import jax
import jax.numpy as jnp
from jax.experimental import pallas as pl
from jax.experimental.pallas import tpu as pltpu

_LANE = 128


def _bcast_kernel(z_ref, out_ref):
    # z_ref:   (tR, C)              one input tile
    # out_ref: (num_heads, tR, C)   all head copies of that tile
    out_ref[...] = jnp.broadcast_to(z_ref[...], out_ref.shape)


def _expand_call(z2d: jax.Array, num_heads: int, tile_rows: int) -> jax.Array:
    """Broadcast a 2D (R, C) array to (num_heads, R, C) via one pallas_call."""
    R, C = z2d.shape
    grid = (pl.cdiv(R, tile_rows),)
    return pl.pallas_call(
        _bcast_kernel,
        out_shape=jax.ShapeDtypeStruct((num_heads, R, C), z2d.dtype),
        grid_spec=pl.GridSpec(
            grid=grid,
            in_specs=[pl.BlockSpec((tile_rows, C), lambda i: (i, 0))],
            out_specs=pl.BlockSpec((num_heads, tile_rows, C), lambda i: (0, i, 0)),
        ),
        compiler_params=pltpu.CompilerParams(
            # Row-tile axis is independent work -> megacore/TC sharding.
            dimension_semantics=("parallel",),
        ),
    )(z2d)


def _row_tile(rows: int, per_row_out_bytes: int, sublane: int) -> int:
    """Row-tile size: sublane-aligned, output tile capped so double-buffered
    in+out tiles stay well under the default scoped VMEM on every TPU gen."""
    if rows <= sublane:
        return rows  # full-extent dim (always a legal block dim)
    budget = 3 << 20  # ~3 MiB output tile -> ~8 MiB total with double buffering
    t = max(sublane, (budget // max(per_row_out_bytes, 1)) // sublane * sublane)
    return min(t, (rows // sublane) * sublane)


def _expand_lane_dense(z: jax.Array, num_heads: int) -> jax.Array:
    """Fast path: z.size % 128 == 0 -> zero-copy lane-dense layout."""
    n = z.size
    itemsize = jnp.dtype(z.dtype).itemsize
    c = _LANE
    for cand in (1024, 512, 256, 128):
        if n % cand == 0:
            c = cand
            break
    rows = n // c
    z2d = z.reshape(rows, c)  # contiguous reshape: no copy
    sublane = max(8, 32 // itemsize)
    t_r = _row_tile(rows, num_heads * c * itemsize, sublane)
    out = _expand_call(z2d, num_heads, t_r)  # (num_heads, rows, c)
    return out.reshape((num_heads,) + z.shape)  # contiguous reshape: no copy


def _expand_general(z: jax.Array, num_heads: int) -> jax.Array:
    """Fallback: element count not a multiple of 128.  Natural 2D view with the
    last dim on lanes; stores may be lane-masked but there are no extra copies.
    """
    if z.ndim == 0:
        z2d = z.reshape(1, 1)
    else:
        z2d = z.reshape(-1, z.shape[-1])  # contiguous reshape: no copy
    rows, lane_dim = z2d.shape
    itemsize = jnp.dtype(z.dtype).itemsize
    t_r = _row_tile(rows, num_heads * lane_dim * itemsize, 8)
    out = _expand_call(z2d, num_heads, t_r)  # (num_heads, rows, lane_dim)
    return out.reshape((num_heads,) + z.shape)


def moo_for_loop_forward(z: jax.Array, num_heads: int) -> jax.Array:
    """Pallas equivalent of MOOForLoop.forward: z -> (num_heads, *z.shape)."""
    z = jnp.asarray(z)
    if z.size % _LANE == 0 and z.size > 0:
        return _expand_lane_dense(z, num_heads)
    return _expand_general(z, num_heads)


class MultiMOOForLoopPallas:
    """JAX/Pallas port of MultiMOOForLoop (forward only).

    moo_methods in the original module only influence the backward hook, so
    only their count (num_inputs) matters for the forward pass.
    """

    def __init__(self, num_heads: int, num_moo_methods: int):
        self.num_heads = num_heads
        self.num_inputs = num_moo_methods
        # TODO(synk): the backward-hook MOO gradient surgery (replacing input
        # grads with rescaled MOO directions) has no forward-pass equivalent.

    def __call__(self, *args):
        if len(args) != self.num_inputs:
            raise ValueError(
                f"Expected {self.num_inputs} inputs, got {len(args)} instead."
            )
        results = [moo_for_loop_forward(z, self.num_heads) for z in args]
        # Mirror the generator semantics of the PyTorch module.
        return (r for r in results)


if __name__ == "__main__":
    key = jax.random.PRNGKey(0)
    k1, k2 = jax.random.split(key)

    num_heads = 3
    z0 = jax.random.normal(k1, (2, 32), dtype=jnp.float32)      # N=64  -> fallback path
    z1 = jax.random.normal(k2, (2, 4, 16), dtype=jnp.float32)   # N=128 -> lane-dense path

    module = MultiMOOForLoopPallas(num_heads=num_heads, num_moo_methods=2)
    outputs = list(module(z0, z1))
    outputs = [jax.block_until_ready(o) for o in outputs]

    # Correctness check against the reference broadcast semantics.
    ref0 = jnp.broadcast_to(z0[None], (num_heads,) + z0.shape)
    ref1 = jnp.broadcast_to(z1[None], (num_heads,) + z1.shape)
    assert outputs[0].shape == (num_heads,) + z0.shape
    assert outputs[1].shape == (num_heads,) + z1.shape
    assert outputs[0].dtype == z0.dtype and outputs[1].dtype == z1.dtype
    assert jnp.array_equal(outputs[0], ref0)
    assert jnp.array_equal(outputs[1], ref1)

    print("KERNEL_OK")
</pallas_src>

<mosaic_0001>
module attributes {stable_mosaic.version = 11 : i64} {
  func.func @_bcast_kernel(%arg0: i32, %arg1: memref<2x32xf32, #tpu.memory_space<vmem>>, %arg2: memref<3x2x32xf32, #tpu.memory_space<vmem>>) attributes {dimension_semantics = [#tpu.dimension_semantics<parallel>], iteration_bounds = array<i64: 1>, scalar_prefetch = 0 : i64, scratch_operands = 0 : i64, tpu.core_type = #tpu.core_type<tc>, window_params = [{transform_indices = @transform_0, window_bounds = array<i64: 2, 32>}, {transform_indices = @transform_1, window_bounds = array<i64: 3, 2, 32>}]} {
    %c0 = arith.constant 0 : index
    %c0_0 = arith.constant 0 : index
    %0 = vector.load %arg1[%c0, %c0_0] : memref<2x32xf32, #tpu.memory_space<vmem>>, vector<2x32xf32>
    %1 = vector.shape_cast %0 : vector<2x32xf32> to vector<1x2x32xf32>
    %2 = vector.broadcast %1 : vector<1x2x32xf32> to vector<3x2x32xf32>
    %c0_1 = arith.constant 0 : index
    %c0_2 = arith.constant 0 : index
    %c0_3 = arith.constant 0 : index
    %3 = vector.load %arg2[%c0_1, %c0_2, %c0_3] : memref<3x2x32xf32, #tpu.memory_space<vmem>>, vector<3x2x32xf32>
    tpu.vector_store %arg2[%c0_1, %c0_2, %c0_3], %2 {strides = array<i32>} : memref<3x2x32xf32, #tpu.memory_space<vmem>>, vector<3x2x32xf32>,
    return
  }
  func.func @transform_0(%arg0: i32) -> (i32, i32) {
    %c0_i32 = arith.constant 0 : i32
    %c0_i32_0 = arith.constant 0 : i32
    return %arg0, %c0_i32 : i32, i32
  }
  func.func @transform_1(%arg0: i32) -> (i32, i32, i32) {
    %c0_i32 = arith.constant 0 : i32
    %c0_i32_0 = arith.constant 0 : i32
    %c0_i32_1 = arith.constant 0 : i32
    return %c0_i32, %arg0, %c0_i32_0 : i32, i32, i32
  }
}

</mosaic_0001>

<llo_original>
// kernel: tpu_custom_call.1
$region0: #{tpu_custom_call.1}
  #allocation0 [shape = 'u32[]', space=smem, size = 0x4, offset = 0x4, fixed_abs, tag = 'smem constant byte address 0x4 - core index']
  #allocation1 [shape = 'u32[144,128]{1,0:T(1,128)}', space=vmem, size = 0x12000, scoped, tag = 'internal scratch']
  %s0 = inlined_call_operand.hbm [shape: f32[2,32], index: 0, kind: input, shape index: {}]
  %s1 = inlined_call_operand.hbm [shape: f32[3,2,32], index: 1, kind: output, shape index: {}]
  %s2 = sld [smem:[#allocation0]]
  $region18: #{tpu_custom_call.1} parent=0
    _
  %s4 = ssub.s32 1, %s2
  %s5 = scalar_select 0, %s4, %s2
  $region1: #{tpu_custom_call.1} parent=0
    #allocation2 [shape = 'u8[1024]{0}', space=vmem, size = 0x400, scoped, tag = 'input window, operand 0, single buffered']
    #allocation3 [shape = 's32[1]{0}', space=sflag, size = 0x4, scoped, tag = 'scoped memory for tpu_custom_call.1']
    #allocation4 [shape = 's32[1]{0}', space=sflag, size = 0x4, scoped, tag = 'scoped memory for tpu_custom_call.1']
    #allocation5 [shape = 'u8[3072]{0}', space=vmem, size = 0xc00, scoped, tag = 'output window, operand 0, single buffered']
    %6 = vsyncpa [#allocation3], 0
    %7 = vsyncpa [#allocation4], 0
    // Predicated region
    $region2: #{tpu_custom_call.1} parent=1 // pred_check
      _
    $region3: #{tpu_custom_call.1} parent=1 // pred_check_branch
      %9 = sbr.rel (0) target = $region5
    $region4: #{tpu_custom_call.1} parent=1 // pred_region
      %s11 = ssub.s32 32, 32
      %12 = vsyncadd [#allocation3], %s11
      %s14 = sshll.u32 [#allocation2], 4
      %s15 = int_to_ptr.vmem [resolvable:$true] %s14
      %17 = dma.hbm_to_vmem [thread:$0]  %s0, 32, %s15, [#allocation3]
    $region5: #{tpu_custom_call.1} parent=1 // pred_fallthru
      _
    // Predicated region
    $region6: #{tpu_custom_call.1} parent=1 // pred_check
      _
    $region7: #{tpu_custom_call.1} parent=1 // pred_check_branch
      %19 = sbr.rel (0) target = $region9
    $region8: #{tpu_custom_call.1} parent=1 // pred_region
      %20 = dma.done [#allocation3], 32
    $region9: #{tpu_custom_call.1} parent=1 // pred_fallthru
      _
    %v21 = vld [vmem:[#allocation2] sm:$0x3]
    %vm22 = vcmask 254976
    %23 = vst.msk [vmem:[#allocation5] sm:$0x3] %vm22, %v21
    %24 = vst.msk [vmem:[#allocation5 + $0x2] sm:$0x3] %vm22, %v21
    %25 = vst.msk [vmem:[#allocation5 + $0x4] sm:$0x3] %vm22, %v21
    // Predicated region
    $region10: #{tpu_custom_call.1} parent=1 // pred_check
      _
    $region11: #{tpu_custom_call.1} parent=1 // pred_check_branch
      %27 = sbr.rel (0) target = $region13
    $region12: #{tpu_custom_call.1} parent=1 // pred_region
      %s29 = ssub.s32 96, 96
      %30 = vsyncadd [#allocation4], %s29
      %s31 = sshll.u32 [#allocation5], 4
      %s32 = int_to_ptr.vmem [resolvable:$true] %s31
      %37 = dma.vmem_to_hbm [thread:$0]  %s32, 96, %s1, [#allocation4], 32, 32, 2
    $region13: #{tpu_custom_call.1} parent=1 // pred_fallthru
      _
    // Predicated region
    $region14: #{tpu_custom_call.1} parent=1 // pred_check
      _
    $region15: #{tpu_custom_call.1} parent=1 // pred_check_branch
      %39 = sbr.rel (0) target = $region17
    $region16: #{tpu_custom_call.1} parent=1 // pred_region
      %40 = dma.done [#allocation4], 96
    $region17: #{tpu_custom_call.1} parent=1 // pred_fallthru
      _
    %41 = vsyncpa [#allocation3], 1
    %42 = vsyncpa [#allocation4], 1

</llo_original>
